<compile_context>
chip_gen: v5e
topology: v5e:2x2
jax: 0.10.0
libtpu: 0.0.40
codegen_flags: <defaults>
</compile_context>

<pallas_src>
import functools

import jax
import jax.numpy as jnp
from jax.experimental import pallas as pl
from jax.experimental.pallas import tpu as pltpu

LANE = 128
TILE_B_MAX = 1024        # rows per grid step; ~8 MB VMEM at this size
IN_FEATURES = 28 * 28    # 784
N_CLASSES = 10


def _round_up(n, m):
    return ((n + m - 1) // m) * m


def _choose_tile_b(B):
    """>=2 grid steps when the batch allows (v7x megacore), tiles a multiple
    of 256 when large (full MXU passes), capped at TILE_B_MAX, and never
    larger than the 8-row-rounded batch (no pointless padded rows)."""
    b8 = _round_up(B, 8)
    tile = _round_up(pl.cdiv(B, 2), 256)
    return int(max(8, min(tile, TILE_B_MAX, b8)))


def mlp_kernel(x_ref, w1_ref, b1_ref, w2_ref, b2_ref, w3_ref, b3_ref,
               w4_ref, b4_ref, o_ref):
    """Fused 4-layer MLP on one (tile_b, 784) batch tile.

    MXU operands are bf16; accumulation, bias-add and ReLU are f32 (v5e-safe).
    """
    x = x_ref[...].astype(jnp.bfloat16)        # in-kernel cast, no HBM copy
    # Layer 1: Linear(784 -> H) + ReLU
    h = jnp.dot(x, w1_ref[...], preferred_element_type=jnp.float32)
    h = jnp.maximum(h + b1_ref[...], 0.0)
    # Layer 2: Linear(H -> H) + ReLU
    h = jnp.dot(h.astype(jnp.bfloat16), w2_ref[...],
                preferred_element_type=jnp.float32)
    h = jnp.maximum(h + b2_ref[...], 0.0)
    # Layer 3: Linear(H -> H) + ReLU
    h = jnp.dot(h.astype(jnp.bfloat16), w3_ref[...],
                preferred_element_type=jnp.float32)
    h = jnp.maximum(h + b3_ref[...], 0.0)
    # Layer 4: Linear(H -> 10), no activation (padded output lanes stay 0)
    o_ref[...] = jnp.dot(h.astype(jnp.bfloat16), w4_ref[...],
                         preferred_element_type=jnp.float32) + b4_ref[...]


def prepare_params(params):
    """One-time parameter prep (call once, reuse across forward calls).

    Weights -> bf16, zero-padded to 128-lane-dense *output* dims; biases ->
    f32 (1, out_pad).  The contraction dim of w1 stays 784 to match the
    unpadded x stream.  Zero padding keeps padded hidden/output lanes exactly
    0 through bias+ReLU, so results are unchanged.
    """
    (w1, b1), (w2, b2), (w3, b3), (w4, b4) = params
    K, H = w1.shape
    N = w4.shape[1]
    H_pad = _round_up(H, LANE)      # 32  -> 128
    N_pad = _round_up(N, LANE)      # 10  -> 128

    def padw(w, rows, cols):
        return jnp.pad(w.astype(jnp.bfloat16),
                       ((0, rows - w.shape[0]), (0, cols - w.shape[1])))

    def padb(b, cols):
        b = b.astype(jnp.float32).reshape(1, -1)
        return jnp.pad(b, ((0, 0), (0, cols - b.shape[1])))

    return (padw(w1, K, H_pad), padb(b1, H_pad),
            padw(w2, H_pad, H_pad), padb(b2, H_pad),
            padw(w3, H_pad, H_pad), padb(b3, H_pad),
            padw(w4, H_pad, N_pad), padb(b4, N_pad))


@functools.partial(jax.jit, static_argnames=("n_out",))
def mlp_forward(x, prepped, *, n_out=N_CLASSES):
    """x: (B, 784) f32, prepped: output of prepare_params().

    Returns (B, n_out) f32 logits matching the PyTorch forward (up to bf16
    matmul-input precision).
    """
    w1p, b1p, w2p, b2p, w3p, b3p, w4p, b4p = prepped
    B, K = x.shape
    N_pad = w4p.shape[1]

    tile_b = _choose_tile_b(B)
    grid = (pl.cdiv(B, tile_b),)       # partial last tile handled by Pallas

    def const_spec(shape):
        # Same block every grid step -> parameters stay VMEM-resident.
        return pl.BlockSpec(shape, lambda i: (0,) * len(shape))

    out_padded = pl.pallas_call(
        mlp_kernel,
        out_shape=jax.ShapeDtypeStruct((B, N_pad), jnp.float32),
        grid=grid,
        in_specs=[
            # x: batch-tiled, UNPADDED f32 (last dim 784 == full array dim).
            pl.BlockSpec((tile_b, K), lambda i: (i, 0)),
            const_spec(w1p.shape), const_spec(b1p.shape),   # layer 1
            const_spec(w2p.shape), const_spec(b2p.shape),   # layer 2
            const_spec(w3p.shape), const_spec(b3p.shape),   # layer 3
            const_spec(w4p.shape), const_spec(b4p.shape),   # layer 4
        ],
        out_specs=pl.BlockSpec((tile_b, N_pad), lambda i: (i, 0)),
        compiler_params=pltpu.CompilerParams(
            dimension_semantics=("parallel",),   # megacore sharding on v7x
            vmem_limit_bytes=32 * 1024 * 1024,   # v5e-safe headroom
        ),
    )(x, w1p, b1p, w2p, b2p, w3p, b3p, w4p, b4p)

    # TODO(synk): optional bf16 logits store / fp8 (e4m3) layer-1 operands on
    # v7x for a further HBM-byte cut, if accuracy budget allows.
    return out_padded[:, :n_out]   # drop padded output lanes (lane-dense store kept)


def init_linear(key, fan_in, fan_out):
    """PyTorch nn.Linear default init: U(-1/sqrt(fan_in), 1/sqrt(fan_in))."""
    kw, kb = jax.random.split(key)
    bound = 1.0 / jnp.sqrt(fan_in)
    # Stored as (in, out) so the kernel computes x @ W + b.
    w = jax.random.uniform(kw, (fan_in, fan_out), jnp.float32, -bound, bound)
    b = jax.random.uniform(kb, (fan_out,), jnp.float32, -bound, bound)
    return w, b


if __name__ == "__main__":
    key = jax.random.PRNGKey(0)
    hidden = 32
    batch = 8

    k_x, k1, k2, k3, k4 = jax.random.split(key, 5)
    x = jax.random.normal(k_x, (batch, IN_FEATURES), jnp.float32)

    params = (
        init_linear(k1, IN_FEATURES, hidden),
        init_linear(k2, hidden, hidden),
        init_linear(k3, hidden, hidden),
        init_linear(k4, hidden, N_CLASSES),
    )

    # One-time parameter prep (cached/reused across forward calls).
    prepped = jax.block_until_ready(prepare_params(params))

    out = jax.block_until_ready(mlp_forward(x, prepped))
    assert out.shape == (batch, N_CLASSES), out.shape

    # Pure-JAX f32 reference (PyTorch semantics). Kernel uses bf16 MXU inputs
    # with f32 accumulation, so tolerance is relaxed accordingly.
    h = x
    for i, (w, b) in enumerate(params):
        h = h @ w + b
        if i < 3:
            h = jnp.maximum(h, 0.0)
    max_err = float(jnp.max(jnp.abs(out - h)))
    assert jnp.allclose(out, h, atol=5e-2, rtol=5e-2), max_err

    print("KERNEL_OK")
</pallas_src>

<mosaic_0001>
module attributes {stable_mosaic.version = 11 : i64} {
  func.func @mlp_kernel(%arg0: i32, %arg1: memref<8x784xf32, #tpu.memory_space<vmem>>, %arg2: memref<784x128xbf16, #tpu.memory_space<vmem>>, %arg3: memref<1x128xf32, #tpu.memory_space<vmem>>, %arg4: memref<128x128xbf16, #tpu.memory_space<vmem>>, %arg5: memref<1x128xf32, #tpu.memory_space<vmem>>, %arg6: memref<128x128xbf16, #tpu.memory_space<vmem>>, %arg7: memref<1x128xf32, #tpu.memory_space<vmem>>, %arg8: memref<128x128xbf16, #tpu.memory_space<vmem>>, %arg9: memref<1x128xf32, #tpu.memory_space<vmem>>, %arg10: memref<8x128xf32, #tpu.memory_space<vmem>>) attributes {dimension_semantics = [#tpu.dimension_semantics<parallel>], iteration_bounds = array<i64: 1>, scalar_prefetch = 0 : i64, scratch_operands = 0 : i64, tpu.core_type = #tpu.core_type<tc>, window_params = [{transform_indices = @transform_0, window_bounds = array<i64: 8, 784>}, {pipeline_mode = #tpu.pipeline_mode<synchronous>, transform_indices = @transform_1, window_bounds = array<i64: 784, 128>}, {pipeline_mode = #tpu.pipeline_mode<synchronous>, transform_indices = @transform_2, window_bounds = array<i64: 1, 128>}, {pipeline_mode = #tpu.pipeline_mode<synchronous>, transform_indices = @transform_3, window_bounds = array<i64: 128, 128>}, {pipeline_mode = #tpu.pipeline_mode<synchronous>, transform_indices = @transform_4, window_bounds = array<i64: 1, 128>}, {pipeline_mode = #tpu.pipeline_mode<synchronous>, transform_indices = @transform_5, window_bounds = array<i64: 128, 128>}, {pipeline_mode = #tpu.pipeline_mode<synchronous>, transform_indices = @transform_6, window_bounds = array<i64: 1, 128>}, {pipeline_mode = #tpu.pipeline_mode<synchronous>, transform_indices = @transform_7, window_bounds = array<i64: 128, 128>}, {pipeline_mode = #tpu.pipeline_mode<synchronous>, transform_indices = @transform_8, window_bounds = array<i64: 1, 128>}, {transform_indices = @transform_9, window_bounds = array<i64: 8, 128>}]} {
    %c0 = arith.constant 0 : index
    %c0_0 = arith.constant 0 : index
    %0 = vector.load %arg1[%c0, %c0_0] : memref<8x784xf32, #tpu.memory_space<vmem>>, vector<8x784xf32>
    %1 = arith.truncf %0 : vector<8x784xf32> to vector<8x784xbf16>
    %c0_1 = arith.constant 0 : index
    %c0_2 = arith.constant 0 : index
    %2 = vector.load %arg2[%c0_1, %c0_2] : memref<784x128xbf16, #tpu.memory_space<vmem>>, vector<784x128xbf16>
    %cst = arith.constant dense<0.000000e+00> : vector<8x128xf32>
    %3 = tpu.matmul %1, %2, %cst {dimension_numbers = #tpu.dot_dimension_numbers<[1], [0], [0], [1], [0, 0, 1, 1], [], []>} : vector<8x784xbf16>, vector<784x128xbf16>, vector<8x128xf32> -> vector<8x128xf32>
    %c0_3 = arith.constant 0 : index
    %c0_4 = arith.constant 0 : index
    %4 = vector.load %arg3[%c0_3, %c0_4] : memref<1x128xf32, #tpu.memory_space<vmem>>, vector<1x128xf32>
    %5 = vector.broadcast %4 : vector<1x128xf32> to vector<8x128xf32>
    %6 = arith.addf %3, %5 : vector<8x128xf32>
    %cst_5 = arith.constant 0.000000e+00 : f32
    %7 = vector.broadcast %cst_5 : f32 to vector<8x128xf32>
    %8 = arith.maximumf %6, %7 : vector<8x128xf32>
    %9 = arith.truncf %8 : vector<8x128xf32> to vector<8x128xbf16>
    %c0_6 = arith.constant 0 : index
    %c0_7 = arith.constant 0 : index
    %10 = vector.load %arg4[%c0_6, %c0_7] : memref<128x128xbf16, #tpu.memory_space<vmem>>, vector<128x128xbf16>
    %cst_8 = arith.constant dense<0.000000e+00> : vector<8x128xf32>
    %11 = tpu.matmul %9, %10, %cst_8 {dimension_numbers = #tpu.dot_dimension_numbers<[1], [0], [0], [1], [0, 0, 1, 1], [], []>} : vector<8x128xbf16>, vector<128x128xbf16>, vector<8x128xf32> -> vector<8x128xf32>
    %c0_9 = arith.constant 0 : index
    %c0_10 = arith.constant 0 : index
    %12 = vector.load %arg5[%c0_9, %c0_10] : memref<1x128xf32, #tpu.memory_space<vmem>>, vector<1x128xf32>
    %13 = vector.broadcast %12 : vector<1x128xf32> to vector<8x128xf32>
    %14 = arith.addf %11, %13 : vector<8x128xf32>
    %cst_11 = arith.constant 0.000000e+00 : f32
    %15 = vector.broadcast %cst_11 : f32 to vector<8x128xf32>
    %16 = arith.maximumf %14, %15 : vector<8x128xf32>
    %17 = arith.truncf %16 : vector<8x128xf32> to vector<8x128xbf16>
    %c0_12 = arith.constant 0 : index
    %c0_13 = arith.constant 0 : index
    %18 = vector.load %arg6[%c0_12, %c0_13] : memref<128x128xbf16, #tpu.memory_space<vmem>>, vector<128x128xbf16>
    %cst_14 = arith.constant dense<0.000000e+00> : vector<8x128xf32>
    %19 = tpu.matmul %17, %18, %cst_14 {dimension_numbers = #tpu.dot_dimension_numbers<[1], [0], [0], [1], [0, 0, 1, 1], [], []>} : vector<8x128xbf16>, vector<128x128xbf16>, vector<8x128xf32> -> vector<8x128xf32>
    %c0_15 = arith.constant 0 : index
    %c0_16 = arith.constant 0 : index
    %20 = vector.load %arg7[%c0_15, %c0_16] : memref<1x128xf32, #tpu.memory_space<vmem>>, vector<1x128xf32>
    %21 = vector.broadcast %20 : vector<1x128xf32> to vector<8x128xf32>
    %22 = arith.addf %19, %21 : vector<8x128xf32>
    %cst_17 = arith.constant 0.000000e+00 : f32
    %23 = vector.broadcast %cst_17 : f32 to vector<8x128xf32>
    %24 = arith.maximumf %22, %23 : vector<8x128xf32>
    %25 = arith.truncf %24 : vector<8x128xf32> to vector<8x128xbf16>
    %c0_18 = arith.constant 0 : index
    %c0_19 = arith.constant 0 : index
    %26 = vector.load %arg8[%c0_18, %c0_19] : memref<128x128xbf16, #tpu.memory_space<vmem>>, vector<128x128xbf16>
    %cst_20 = arith.constant dense<0.000000e+00> : vector<8x128xf32>
    %27 = tpu.matmul %25, %26, %cst_20 {dimension_numbers = #tpu.dot_dimension_numbers<[1], [0], [0], [1], [0, 0, 1, 1], [], []>} : vector<8x128xbf16>, vector<128x128xbf16>, vector<8x128xf32> -> vector<8x128xf32>
    %c0_21 = arith.constant 0 : index
    %c0_22 = arith.constant 0 : index
    %28 = vector.load %arg9[%c0_21, %c0_22] : memref<1x128xf32, #tpu.memory_space<vmem>>, vector<1x128xf32>
    %29 = vector.broadcast %28 : vector<1x128xf32> to vector<8x128xf32>
    %30 = arith.addf %27, %29 : vector<8x128xf32>
    %c0_23 = arith.constant 0 : index
    %c0_24 = arith.constant 0 : index
    %31 = vector.load %arg10[%c0_23, %c0_24] : memref<8x128xf32, #tpu.memory_space<vmem>>, vector<8x128xf32>
    tpu.vector_store %arg10[%c0_23, %c0_24], %30 {strides = array<i32>} : memref<8x128xf32, #tpu.memory_space<vmem>>, vector<8x128xf32>,
    return
  }
  func.func @transform_0(%arg0: i32) -> (i32, i32) {
    %c0_i32 = arith.constant 0 : i32
    %c0_i32_0 = arith.constant 0 : i32
    return %arg0, %c0_i32 : i32, i32
  }
  func.func @transform_1(%arg0: i32) -> (i32, i32) {
    %c0_i32 = arith.constant 0 : i32
    %c0_i32_0 = arith.constant 0 : i32
    %c0_i32_1 = arith.constant 0 : i32
    return %c0_i32, %c0_i32_0 : i32, i32
  }
  func.func @transform_2(%arg0: i32) -> (i32, i32) {
    %c0_i32 = arith.constant 0 : i32
    %c0_i32_0 = arith.constant 0 : i32
    %c0_i32_1 = arith.constant 0 : i32
    return %c0_i32, %c0_i32_0 : i32, i32
  }
  func.func @transform_3(%arg0: i32) -> (i32, i32) {
    %c0_i32 = arith.constant 0 : i32
    %c0_i32_0 = arith.constant 0 : i32
    %c0_i32_1 = arith.constant 0 : i32
    return %c0_i32, %c0_i32_0 : i32, i32
  }
  func.func @transform_4(%arg0: i32) -> (i32, i32) {
    %c0_i32 = arith.constant 0 : i32
    %c0_i32_0 = arith.constant 0 : i32
    %c0_i32_1 = arith.constant 0 : i32
    return %c0_i32, %c0_i32_0 : i32, i32
  }
  func.func @transform_5(%arg0: i32) -> (i32, i32) {
    %c0_i32 = arith.constant 0 : i32
    %c0_i32_0 = arith.constant 0 : i32
    %c0_i32_1 = arith.constant 0 : i32
    return %c0_i32, %c0_i32_0 : i32, i32
  }
  func.func @transform_6(%arg0: i32) -> (i32, i32) {
    %c0_i32 = arith.constant 0 : i32
    %c0_i32_0 = arith.constant 0 : i32
    %c0_i32_1 = arith.constant 0 : i32
    return %c0_i32, %c0_i32_0 : i32, i32
  }
  func.func @transform_7(%arg0: i32) -> (i32, i32) {
    %c0_i32 = arith.constant 0 : i32
    %c0_i32_0 = arith.constant 0 : i32
    %c0_i32_1 = arith.constant 0 : i32
    return %c0_i32, %c0_i32_0 : i32, i32
  }
  func.func @transform_8(%arg0: i32) -> (i32, i32) {
    %c0_i32 = arith.constant 0 : i32
    %c0_i32_0 = arith.constant 0 : i32
    %c0_i32_1 = arith.constant 0 : i32
    return %c0_i32, %c0_i32_0 : i32, i32
  }
  func.func @transform_9(%arg0: i32) -> (i32, i32) {
    %c0_i32 = arith.constant 0 : i32
    %c0_i32_0 = arith.constant 0 : i32
    return %arg0, %c0_i32 : i32, i32
  }
}

</mosaic_0001>

<llo_original>
// kernel: mlp_forward.1
$region0: #{mlp_forward.1}
  #allocation0 [shape = 'u32[]', space=smem, size = 0x4, offset = 0x4, fixed_abs, tag = 'smem constant byte address 0x4 - core index']
  #allocation1 [shape = 'u32[72,128]{1,0:T(1,128)}', space=vmem, size = 0x9000, scoped, tag = 'internal scratch']
  %s0 = inlined_call_operand.hbm [shape: f32[8,784], index: 0, kind: input, shape index: {}]
  %s1 = inlined_call_operand.hbm [shape: bf16[784,128], index: 1, kind: input, shape index: {}]
  %s2 = inlined_call_operand.vmem [shape: f32[1,128], index: 2, kind: input, shape index: {}]
  %s3 = inlined_call_operand.hbm [shape: bf16[128,128], index: 3, kind: input, shape index: {}]
  %s4 = inlined_call_operand.vmem [shape: f32[1,128], index: 4, kind: input, shape index: {}]
  %s5 = inlined_call_operand.hbm [shape: bf16[128,128], index: 5, kind: input, shape index: {}]
  %s6 = inlined_call_operand.vmem [shape: f32[1,128], index: 6, kind: input, shape index: {}]
  %s7 = inlined_call_operand.hbm [shape: bf16[128,128], index: 7, kind: input, shape index: {}]
  %s8 = inlined_call_operand.vmem [shape: f32[1,128], index: 8, kind: input, shape index: {}]
  %s9 = inlined_call_operand.hbm [shape: f32[8,128], index: 9, kind: output, shape index: {}]
  %s10 = sld [smem:[#allocation0]]
  $region66: #{mlp_forward.1} parent=0
    _
  %s12 = ssub.s32 1, %s10
  %s13 = scalar_select 0, %s12, %s10
  $region1: #{mlp_forward.1} parent=0
    #allocation2 [shape = 'u8[28672]{0}', space=vmem, size = 0x7000, scoped, tag = 'input window, operand 0, single buffered']
    #allocation3 [shape = 's32[1]{0}', space=sflag, size = 0x4, scoped, tag = 'scoped memory for mlp_forward.1']
    #allocation4 [shape = 's32[1]{0}', space=sflag, size = 0x4, scoped, tag = 'scoped memory for mlp_forward.1']
    #allocation5 [shape = 'u8[200704]{0}', space=vmem, size = 0x31000, scoped, tag = 'input window, operand 1, single buffered']
    #allocation6 [shape = 's32[1]{0}', space=sflag, size = 0x4, scoped, tag = 'scoped memory for mlp_forward.1']
    #allocation7 [shape = 'u8[32768]{0}', space=vmem, size = 0x8000, scoped, tag = 'input window, operand 3, single buffered']
    #allocation8 [shape = 'u8[32768]{0}', space=vmem, size = 0x8000, scoped, tag = 'input window, operand 5, single buffered']
    #allocation9 [shape = 's32[1]{0}', space=sflag, size = 0x4, scoped, tag = 'scoped memory for mlp_forward.1']
    #allocation10 [shape = 'u8[32768]{0}', space=vmem, size = 0x8000, scoped, tag = 'input window, operand 7, single buffered']
    #allocation11 [shape = 'u8[4096]{0}', space=vmem, size = 0x1000, scoped, tag = 'output window, operand 0, single buffered']
    %14 = vsyncpa [#allocation3], 0
    %15 = vsyncpa [#allocation6], 0
    %16 = vsyncpa [#allocation9], 0
    %17 = vsyncpa [#allocation4], 0
    // Predicated region
    $region2: #{mlp_forward.1} parent=1 // pred_check
      _
    $region3: #{mlp_forward.1} parent=1 // pred_check_branch
      %19 = sbr.rel (0) target = $region5
    $region4: #{mlp_forward.1} parent=1 // pred_region
      %21 = vsyncadd [#allocation3], 0
      %s23 = sshll.u32 %s0, 4
      %s24 = int_to_ptr.hbm [resolvable:$true] %s23
      %s25 = sshll.u32 [#allocation2], 4
      %s26 = int_to_ptr.vmem [resolvable:$true] %s25
      %28 = dma.hbm_to_vmem [thread:$0]  %s24, 896, %s26, [#allocation3]
    $region5: #{mlp_forward.1} parent=1 // pred_fallthru
      _
    // Predicated region
    $region6: #{mlp_forward.1} parent=1 // pred_check
      _
    $region7: #{mlp_forward.1} parent=1 // pred_check_branch
      %30 = sbr.rel (0) target = $region9
    $region8: #{mlp_forward.1} parent=1 // pred_region
      %32 = vsyncadd [#allocation6], 0
      %s33 = sshll.u32 %s1, 4
      %s34 = int_to_ptr.hbm [resolvable:$true] %s33
      %s35 = sshll.u32 [#allocation5], 4
      %s36 = int_to_ptr.vmem [resolvable:$true] %s35
      %41 = dma.hbm_to_vmem [thread:$0]  %s34, 6272, %s36, [#allocation6], 64, 64, 4
    $region9: #{mlp_forward.1} parent=1 // pred_fallthru
      _
    // Predicated region
    $region10: #{mlp_forward.1} parent=1 // pred_check
      _
    $region11: #{mlp_forward.1} parent=1 // pred_check_branch
      %43 = sbr.rel (0) target = $region13
    $region12: #{mlp_forward.1} parent=1 // pred_region
      _
    $region13: #{mlp_forward.1} parent=1 // pred_fallthru
      _
    // Predicated region
    $region14: #{mlp_forward.1} parent=1 // pred_check
      _
    $region15: #{mlp_forward.1} parent=1 // pred_check_branch
      %45 = sbr.rel (0) target = $region17
    $region16: #{mlp_forward.1} parent=1 // pred_region
      %47 = vsyncadd [#allocation6], 0
      %s48 = sshll.u32 %s3, 4
      %s49 = int_to_ptr.hbm [resolvable:$true] %s48
      %s50 = sshll.u32 [#allocation7], 4
      %s51 = int_to_ptr.vmem [resolvable:$true] %s50
      %56 = dma.hbm_to_vmem [thread:$0]  %s49, 1024, %s51, [#allocation6], 64, 64, 4
    $region17: #{mlp_forward.1} parent=1 // pred_fallthru
      _
    // Predicated region
    $region18: #{mlp_forward.1} parent=1 // pred_check
      _
    $region19: #{mlp_forward.1} parent=1 // pred_check_branch
      %58 = sbr.rel (0) target = $region21
    $region20: #{mlp_forward.1} parent=1 // pred_region
      _
    $region21: #{mlp_forward.1} parent=1 // pred_fallthru
      _
    // Predicated region
    $region22: #{mlp_forward.1} parent=1 // pred_check
      _
    $region23: #{mlp_forward.1} parent=1 // pred_check_branch
      %60 = sbr.rel (0) target = $region25
    $region24: #{mlp_forward.1} parent=1 // pred_region
      %62 = vsyncadd [#allocation9], 0
      %s63 = sshll.u32 %s5, 4
      %s64 = int_to_ptr.hbm [resolvable:$true] %s63
      %s65 = sshll.u32 [#allocation8], 4
      %s66 = int_to_ptr.vmem [resolvable:$true] %s65
      %71 = dma.hbm_to_vmem [thread:$0]  %s64, 1024, %s66, [#allocation9], 64, 64, 4
    $region25: #{mlp_forward.1} parent=1 // pred_fallthru
      _
    // Predicated region
    $region26: #{mlp_forward.1} parent=1 // pred_check
      _
    $region27: #{mlp_forward.1} parent=1 // pred_check_branch
      %73 = sbr.rel (0) target = $region29
    $region28: #{mlp_forward.1} parent=1 // pred_region
      _
    $region29: #{mlp_forward.1} parent=1 // pred_fallthru
      _
    // Predicated region
    $region30: #{mlp_forward.1} parent=1 // pred_check
      _
    $region31: #{mlp_forward.1} parent=1 // pred_check_branch
      %75 = sbr.rel (0) target = $region33
    $region32: #{mlp_forward.1} parent=1 // pred_region
      %77 = vsyncadd [#allocation9], 0
      %s78 = sshll.u32 %s7, 4
      %s79 = int_to_ptr.hbm [resolvable:$true] %s78
      %s80 = sshll.u32 [#allocation10], 4
      %s81 = int_to_ptr.vmem [resolvable:$true] %s80
      %86 = dma.hbm_to_vmem [thread:$0]  %s79, 1024, %s81, [#allocation9], 64, 64, 4
    $region33: #{mlp_forward.1} parent=1 // pred_fallthru
      _
    // Predicated region
    $region34: #{mlp_forward.1} parent=1 // pred_check
      _
    $region35: #{mlp_forward.1} parent=1 // pred_check_branch
      %88 = sbr.rel (0) target = $region37
    $region36: #{mlp_forward.1} parent=1 // pred_region
      _
    $region37: #{mlp_forward.1} parent=1 // pred_fallthru
      _
    // Predicated region
    $region38: #{mlp_forward.1} parent=1 // pred_check
      _
    $region39: #{mlp_forward.1} parent=1 // pred_check_branch
      %90 = sbr.rel (0) target = $region41
    $region40: #{mlp_forward.1} parent=1 // pred_region
      %92 = dma.done [#allocation3], 896
    $region41: #{mlp_forward.1} parent=1 // pred_fallthru
      _
    // Predicated region
    $region42: #{mlp_forward.1} parent=1 // pred_check
      _
    $region43: #{mlp_forward.1} parent=1 // pred_check_branch
      %94 = sbr.rel (0) target = $region45
    $region44: #{mlp_forward.1} parent=1 // pred_region
      %96 = dma.done [#allocation6], 6272
    $region45: #{mlp_forward.1} parent=1 // pred_fallthru
      _
    // Predicated region
    $region46: #{mlp_forward.1} parent=1 // pred_check
      _
    $region47: #{mlp_forward.1} parent=1 // pred_check_branch
      %98 = sbr.rel (0) target = $region49
    $region48: #{mlp_forward.1} parent=1 // pred_region
      %100 = dma.done [#allocation6], 1024
    $region49: #{mlp_forward.1} parent=1 // pred_fallthru
      _
    // Predicated region
    $region50: #{mlp_forward.1} parent=1 // pred_check
      _
    $region51: #{mlp_forward.1} parent=1 // pred_check_branch
      %102 = sbr.rel (0) target = $region53
    $region52: #{mlp_forward.1} parent=1 // pred_region
      %104 = dma.done [#allocation9], 1024
    $region53: #{mlp_forward.1} parent=1 // pred_fallthru
      _
    // Predicated region
    $region54: #{mlp_forward.1} parent=1 // pred_check
      _
    $region55: #{mlp_forward.1} parent=1 // pred_check_branch
      %106 = sbr.rel (0) target = $region57
    $region56: #{mlp_forward.1} parent=1 // pred_region
      %108 = dma.done [#allocation9], 1024
    $region57: #{mlp_forward.1} parent=1 // pred_fallthru
      _
    %v110 = vld [vmem:[#allocation2] sm:$0xff]
    %v111 = vld [vmem:[#allocation2 + $0x8] sm:$0xff]
    %v112 = vld [vmem:[#allocation2 + $0x10] sm:$0xff]
    %v113 = vld [vmem:[#allocation2 + $0x18] sm:$0xff]
    %v114 = vld [vmem:[#allocation2 + $0x20] sm:$0xff]
    %v115 = vld [vmem:[#allocation2 + $0x28] sm:$0xff]
    %v116 = vld [vmem:[#allocation2 + $0x30] sm:$0xff]
    %v117 = vpack.c.bf16 %v110, %v110
    %v118 = vpack.c.bf16 %v111, %v111
    %v119 = vpack.c.bf16 %v112, %v112
    %v120 = vpack.c.bf16 %v113, %v113
    %v121 = vpack.c.bf16 %v114, %v114
    %v122 = vpack.c.bf16 %v115, %v115
    %v123 = vpack.c.bf16 %v116, %v116
    %v124 = vld [vmem:[#allocation5] sm:$0xf]
    %v125 = vld [vmem:[#allocation5 + $0x4] sm:$0xf]
    %v126 = vld [vmem:[#allocation5 + $0x8] sm:$0xf]
    %v127 = vld [vmem:[#allocation5 + $0xc] sm:$0xf]
    %v128 = vld [vmem:[#allocation5 + $0x10] sm:$0xf]
    %v129 = vld [vmem:[#allocation5 + $0x14] sm:$0xf]
    %v130 = vld [vmem:[#allocation5 + $0x18] sm:$0xf]
    %v131 = vld [vmem:[#allocation5 + $0x1c] sm:$0xf]
    %v132 = vld [vmem:[#allocation5 + $0x20] sm:$0xf]
    %v133 = vld [vmem:[#allocation5 + $0x24] sm:$0xf]
    %v134 = vld [vmem:[#allocation5 + $0x28] sm:$0xf]
    %v135 = vld [vmem:[#allocation5 + $0x2c] sm:$0xf]
    %v136 = vld [vmem:[#allocation5 + $0x30] sm:$0xf]
    %v137 = vld [vmem:[#allocation5 + $0x34] sm:$0xf]
    %v138 = vld [vmem:[#allocation5 + $0x38] sm:$0xf]
    %v139 = vld [vmem:[#allocation5 + $0x3c] sm:$0xf]
    %v140 = vld [vmem:[#allocation5 + $0x40] sm:$0xf]
    %v141 = vld [vmem:[#allocation5 + $0x44] sm:$0xf]
    %v142 = vld [vmem:[#allocation5 + $0x48] sm:$0xf]
    %v143 = vld [vmem:[#allocation5 + $0x4c] sm:$0xf]
    %v144 = vld [vmem:[#allocation5 + $0x50] sm:$0xf]
    %v145 = vld [vmem:[#allocation5 + $0x54] sm:$0xf]
    %v146 = vld [vmem:[#allocation5 + $0x58] sm:$0xf]
    %v147 = vld [vmem:[#allocation5 + $0x5c] sm:$0xf]
    %v148 = vld [vmem:[#allocation5 + $0x60] sm:$0xf]
    %v149 = vld [vmem:[#allocation5 + $0x64] sm:$0xf]
    %v150 = vld [vmem:[#allocation5 + $0x68] sm:$0xf]
    %v151 = vld [vmem:[#allocation5 + $0x6c] sm:$0xf]
    %v152 = vld [vmem:[#allocation5 + $0x70] sm:$0xf]
    %v153 = vld [vmem:[#allocation5 + $0x74] sm:$0xf]
    %v154 = vld [vmem:[#allocation5 + $0x78] sm:$0xf]
    %v155 = vld [vmem:[#allocation5 + $0x7c] sm:$0xf]
    %v156 = vld [vmem:[#allocation5 + $0x80] sm:$0xf]
    %v157 = vld [vmem:[#allocation5 + $0x84] sm:$0xf]
    %v158 = vld [vmem:[#allocation5 + $0x88] sm:$0xf]
    %v159 = vld [vmem:[#allocation5 + $0x8c] sm:$0xf]
    %v160 = vld [vmem:[#allocation5 + $0x90] sm:$0xf]
    %v161 = vld [vmem:[#allocation5 + $0x94] sm:$0xf]
    %v162 = vld [vmem:[#allocation5 + $0x98] sm:$0xf]
    %v163 = vld [vmem:[#allocation5 + $0x9c] sm:$0xf]
    %v164 = vld [vmem:[#allocation5 + $0xa0] sm:$0xf]
    %v165 = vld [vmem:[#allocation5 + $0xa4] sm:$0xf]
    %v166 = vld [vmem:[#allocation5 + $0xa8] sm:$0xf]
    %v167 = vld [vmem:[#allocation5 + $0xac] sm:$0xf]
    %v168 = vld [vmem:[#allocation5 + $0xb0] sm:$0xf]
    %v169 = vld [vmem:[#allocation5 + $0xb4] sm:$0xf]
    %v170 = vld [vmem:[#allocation5 + $0xb8] sm:$0xf]
    %v171 = vld [vmem:[#allocation5 + $0xbc] sm:$0xf]
    %v172 = vld [vmem:[#allocation5 + $0xc0] sm:$0xf]
    %v173 = vld [vmem:[#allocation5 + $0xc4] sm:$0xf]
    %v174 = vld [vmem:[#allocation5 + $0xc8] sm:$0xf]
    %v175 = vld [vmem:[#allocation5 + $0xcc] sm:$0xf]
    %v176 = vld [vmem:[#allocation5 + $0xd0] sm:$0xf]
    %v177 = vld [vmem:[#allocation5 + $0xd4] sm:$0xf]
    %v178 = vld [vmem:[#allocation5 + $0xd8] sm:$0xf]
    %v179 = vld [vmem:[#allocation5 + $0xdc] sm:$0xf]
    %v180 = vld [vmem:[#allocation5 + $0xe0] sm:$0xf]
    %v181 = vld [vmem:[#allocation5 + $0xe4] sm:$0xf]
    %v182 = vld [vmem:[#allocation5 + $0xe8] sm:$0xf]
    %v183 = vld [vmem:[#allocation5 + $0xec] sm:$0xf]
    %v184 = vld [vmem:[#allocation5 + $0xf0] sm:$0xf]
    %v185 = vld [vmem:[#allocation5 + $0xf4] sm:$0xf]
    %v186 = vld [vmem:[#allocation5 + $0xf8] sm:$0xf]
    %v187 = vld [vmem:[#allocation5 + $0xfc] sm:$0xf]
    %v188 = vld [vmem:[#allocation5 + $0x100] sm:$0xf]
    %v189 = vld [vmem:[#allocation5 + $0x104] sm:$0xf]
    %v190 = vld [vmem:[#allocation5 + $0x108] sm:$0xf]
    %v191 = vld [vmem:[#allocation5 + $0x10c] sm:$0xf]
    %v192 = vld [vmem:[#allocation5 + $0x110] sm:$0xf]
    %v193 = vld [vmem:[#allocation5 + $0x114] sm:$0xf]
    %v194 = vld [vmem:[#allocation5 + $0x118] sm:$0xf]
    %v195 = vld [vmem:[#allocation5 + $0x11c] sm:$0xf]
    %v196 = vld [vmem:[#allocation5 + $0x120] sm:$0xf]
    %v197 = vld [vmem:[#allocation5 + $0x124] sm:$0xf]
    %v198 = vld [vmem:[#allocation5 + $0x128] sm:$0xf]
    %v199 = vld [vmem:[#allocation5 + $0x12c] sm:$0xf]
    %v200 = vld [vmem:[#allocation5 + $0x130] sm:$0xf]
    %v201 = vld [vmem:[#allocation5 + $0x134] sm:$0xf]
    %v202 = vld [vmem:[#allocation5 + $0x138] sm:$0xf]
    %v203 = vld [vmem:[#allocation5 + $0x13c] sm:$0xf]
    %v204 = vld [vmem:[#allocation5 + $0x140] sm:$0xf]
    %v205 = vld [vmem:[#allocation5 + $0x144] sm:$0xf]
    %v206 = vld [vmem:[#allocation5 + $0x148] sm:$0xf]
    %v207 = vld [vmem:[#allocation5 + $0x14c] sm:$0xf]
    %v208 = vld [vmem:[#allocation5 + $0x150] sm:$0xf]
    %v209 = vld [vmem:[#allocation5 + $0x154] sm:$0xf]
    %v210 = vld [vmem:[#allocation5 + $0x158] sm:$0xf]
    %v211 = vld [vmem:[#allocation5 + $0x15c] sm:$0xf]
    %v212 = vld [vmem:[#allocation5 + $0x160] sm:$0xf]
    %v213 = vld [vmem:[#allocation5 + $0x164] sm:$0xf]
    %v214 = vld [vmem:[#allocation5 + $0x168] sm:$0xf]
    %v215 = vld [vmem:[#allocation5 + $0x16c] sm:$0xf]
    %v216 = vld [vmem:[#allocation5 + $0x170] sm:$0xf]
    %v217 = vld [vmem:[#allocation5 + $0x174] sm:$0xf]
    %v218 = vld [vmem:[#allocation5 + $0x178] sm:$0xf]
    %v219 = vld [vmem:[#allocation5 + $0x17c] sm:$0xf]
    %v220 = vld [vmem:[#allocation5 + $0x180] sm:$0xf]
    %v221 = vld [vmem:[#allocation5 + $0x184] sm:$0xf]
    %v222 = vld [vmem:[%s2] sm:$0x1]
    %v224 = vperm.slane %v222, 0
    %v324 = vunpack.c.l.b16 %v124
    %v325 = vunpack.c.l.b16 %v125
    %v326 = vunpack.c.l.b16 %v126
    %v327 = vunpack.c.l.b16 %v127
    %v328 = vunpack.c.l.b16 %v128
    %v329 = vunpack.c.l.b16 %v129
    %v330 = vunpack.c.l.b16 %v130
    %v331 = vunpack.c.l.b16 %v131
    %v332 = vunpack.c.l.b16 %v132
    %v333 = vunpack.c.l.b16 %v133
    %v334 = vunpack.c.l.b16 %v134
    %v335 = vunpack.c.l.b16 %v135
    %v336 = vunpack.c.l.b16 %v136
    %v337 = vunpack.c.l.b16 %v137
    %v338 = vunpack.c.l.b16 %v138
    %v339 = vunpack.c.l.b16 %v139
    %v340 = vunpack.c.l.b16 %v140
    %v341 = vunpack.c.l.b16 %v141
    %v342 = vunpack.c.l.b16 %v142
    %v343 = vunpack.c.l.b16 %v143
    %v344 = vunpack.c.l.b16 %v144
    %v345 = vunpack.c.l.b16 %v145
    %v346 = vunpack.c.l.b16 %v146
    %v347 = vunpack.c.l.b16 %v147
    %v348 = vunpack.c.l.b16 %v148
    %v349 = vunpack.c.l.b16 %v149
    %v350 = vunpack.c.l.b16 %v150
    %v351 = vunpack.c.l.b16 %v151
    %v352 = vunpack.c.l.b16 %v152
    %v353 = vunpack.c.l.b16 %v153
    %v354 = vunpack.c.l.b16 %v154
    %v355 = vunpack.c.l.b16 %v155
    %v356 = vunpack.c.l.b16 %v156
    %v357 = vunpack.c.l.b16 %v157
    %v358 = vunpack.c.l.b16 %v158
    %v359 = vunpack.c.l.b16 %v159
    %v360 = vunpack.c.l.b16 %v160
    %v361 = vunpack.c.l.b16 %v161
    %v362 = vunpack.c.l.b16 %v162
    %v363 = vunpack.c.l.b16 %v163
    %v364 = vunpack.c.l.b16 %v164
    %v365 = vunpack.c.l.b16 %v165
    %v366 = vunpack.c.l.b16 %v166
    %v367 = vunpack.c.l.b16 %v167
    %v368 = vunpack.c.l.b16 %v168
    %v369 = vunpack.c.l.b16 %v169
    %v370 = vunpack.c.l.b16 %v170
    %v371 = vunpack.c.l.b16 %v171
    %v372 = vunpack.c.l.b16 %v172
    %v373 = vunpack.c.l.b16 %v173
    %v374 = vunpack.c.l.b16 %v174
    %v375 = vunpack.c.l.b16 %v175
    %v376 = vunpack.c.l.b16 %v176
    %v377 = vunpack.c.l.b16 %v177
    %v378 = vunpack.c.l.b16 %v178
    %v379 = vunpack.c.l.b16 %v179
    %v380 = vunpack.c.l.b16 %v180
    %v381 = vunpack.c.l.b16 %v181
    %v382 = vunpack.c.l.b16 %v182
    %v383 = vunpack.c.l.b16 %v183
    %v384 = vunpack.c.l.b16 %v184
    %v385 = vunpack.c.l.b16 %v185
    %v386 = vunpack.c.l.b16 %v186
    %v387 = vunpack.c.l.b16 %v187
    %v388 = vunpack.c.l.b16 %v188
    %v389 = vunpack.c.l.b16 %v189
    %v390 = vunpack.c.l.b16 %v190
    %v391 = vunpack.c.l.b16 %v191
    %v392 = vunpack.c.l.b16 %v192
    %v393 = vunpack.c.l.b16 %v193
    %v394 = vunpack.c.l.b16 %v194
    %v395 = vunpack.c.l.b16 %v195
    %v396 = vunpack.c.l.b16 %v196
    %v397 = vunpack.c.l.b16 %v197
    %v398 = vunpack.c.l.b16 %v198
    %v399 = vunpack.c.l.b16 %v199
    %v400 = vunpack.c.l.b16 %v200
    %v401 = vunpack.c.l.b16 %v201
    %v402 = vunpack.c.l.b16 %v202
    %v403 = vunpack.c.l.b16 %v203
    %v404 = vunpack.c.l.b16 %v204
    %v405 = vunpack.c.l.b16 %v205
    %v406 = vunpack.c.l.b16 %v206
    %v407 = vunpack.c.l.b16 %v207
    %v408 = vunpack.c.l.b16 %v208
    %v409 = vunpack.c.l.b16 %v209
    %v410 = vunpack.c.l.b16 %v210
    %v411 = vunpack.c.l.b16 %v211
    %v412 = vunpack.c.l.b16 %v212
    %v413 = vunpack.c.l.b16 %v213
    %v414 = vunpack.c.l.b16 %v214
    %v415 = vunpack.c.l.b16 %v215
    %v416 = vunpack.c.l.b16 %v216
    %v417 = vunpack.c.l.b16 %v217
    %v418 = vunpack.c.l.b16 %v218
    %v419 = vunpack.c.l.b16 %v219
    %v420 = vunpack.c.l.b16 %v220
    %v421 = vunpack.c.l.b16 %v221
    %v422 = vpack.c.b16 %v325, %v324
    %v423 = vpack.c.b16 %v327, %v326
    %v424 = vpack.c.b16 %v329, %v328
    %v425 = vpack.c.b16 %v331, %v330
    %v426 = vpack.c.b16 %v333, %v332
    %v427 = vpack.c.b16 %v335, %v334
    %v428 = vpack.c.b16 %v337, %v336
    %v429 = vpack.c.b16 %v339, %v338
    %v430 = vpack.c.b16 %v341, %v340
    %v431 = vpack.c.b16 %v343, %v342
    %v432 = vpack.c.b16 %v345, %v344
    %v433 = vpack.c.b16 %v347, %v346
    %v434 = vpack.c.b16 %v349, %v348
    %v435 = vpack.c.b16 %v351, %v350
    %v436 = vpack.c.b16 %v353, %v352
    %v437 = vpack.c.b16 %v355, %v354
    %v438 = vpack.c.b16 %v357, %v356
    %v439 = vpack.c.b16 %v359, %v358
    %v440 = vpack.c.b16 %v361, %v360
    %v441 = vpack.c.b16 %v363, %v362
    %v442 = vpack.c.b16 %v365, %v364
    %v443 = vpack.c.b16 %v367, %v366
    %v444 = vpack.c.b16 %v369, %v368
    %v445 = vpack.c.b16 %v371, %v370
    %v446 = vpack.c.b16 %v373, %v372
    %v447 = vpack.c.b16 %v375, %v374
    %v448 = vpack.c.b16 %v377, %v376
    %v449 = vpack.c.b16 %v379, %v378
    %v450 = vpack.c.b16 %v381, %v380
    %v451 = vpack.c.b16 %v383, %v382
    %v452 = vpack.c.b16 %v385, %v384
    %v453 = vpack.c.b16 %v387, %v386
    %v454 = vpack.c.b16 %v389, %v388
    %v455 = vpack.c.b16 %v391, %v390
    %v456 = vpack.c.b16 %v393, %v392
    %v457 = vpack.c.b16 %v395, %v394
    %v458 = vpack.c.b16 %v397, %v396
    %v459 = vpack.c.b16 %v399, %v398
    %v460 = vpack.c.b16 %v401, %v400
    %v461 = vpack.c.b16 %v403, %v402
    %v462 = vpack.c.b16 %v405, %v404
    %v463 = vpack.c.b16 %v407, %v406
    %v464 = vpack.c.b16 %v409, %v408
    %v465 = vpack.c.b16 %v411, %v410
    %v466 = vpack.c.b16 %v413, %v412
    %v467 = vpack.c.b16 %v415, %v414
    %v468 = vpack.c.b16 %v417, %v416
    %v469 = vpack.c.b16 %v419, %v418
    %v470 = vpack.c.b16 %v421, %v420
    %vm520 = vcmask 130048
    %v522 = vsel %vm520, %v123, 0
    %524 = vmatpush.bf16.msra.mxu0 %v429
    %525 = vmatpush.bf16.msra.mxu0 %v428
    %526 = vmatpush.bf16.msra.mxu0 %v427
    %527 = vmatpush.bf16.msra.mxu0 %v426
    %528 = vmatpush.bf16.msra.mxu0 %v425
    %529 = vmatpush.bf16.msra.mxu0 %v424
    %530 = vmatpush.bf16.msra.mxu0 %v423
    %531 = vmatpush.bf16.msra.mxu0 %v422
    %532 = vmatmul.bf16.gmra.mxu0 %v117
    %v533 = vpop.f32.mrf.mxu0
    %v534 = vadd.f32 %v224, %v533
    %v535 = vpop.f32.mrf.mxu0
    %536 = vdwg.mxu0
    %537 = vmatpush.bf16.msra.mxu0 %v437
    %538 = vmatpush.bf16.msra.mxu0 %v436
    %539 = vmatpush.bf16.msra.mxu0 %v435
    %540 = vmatpush.bf16.msra.mxu0 %v434
    %541 = vmatpush.bf16.msra.mxu0 %v433
    %542 = vmatpush.bf16.msra.mxu0 %v432
    %543 = vmatpush.bf16.msra.mxu0 %v431
    %544 = vmatpush.bf16.msra.mxu0 %v430
    %545 = vmatmul.bf16.gmra.mxu0 %v118
    %v546 = vpop.f32.mrf.mxu0
    %v547 = vadd.f32 %v534, %v546
    %v548 = vpop.f32.mrf.mxu0
    %549 = vdwg.mxu0
    %550 = vmatpush.bf16.msra.mxu0 %v445
    %551 = vmatpush.bf16.msra.mxu0 %v444
    %552 = vmatpush.bf16.msra.mxu0 %v443
    %553 = vmatpush.bf16.msra.mxu0 %v442
    %554 = vmatpush.bf16.msra.mxu0 %v441
    %555 = vmatpush.bf16.msra.mxu0 %v440
    %556 = vmatpush.bf16.msra.mxu0 %v439
    %557 = vmatpush.bf16.msra.mxu0 %v438
    %558 = vmatmul.bf16.gmra.mxu0 %v119
    %v559 = vpop.f32.mrf.mxu0
    %v560 = vadd.f32 %v547, %v559
    %v561 = vpop.f32.mrf.mxu0
    %562 = vdwg.mxu0
    %563 = vmatpush.bf16.msra.mxu0 %v453
    %564 = vmatpush.bf16.msra.mxu0 %v452
    %565 = vmatpush.bf16.msra.mxu0 %v451
    %566 = vmatpush.bf16.msra.mxu0 %v450
    %567 = vmatpush.bf16.msra.mxu0 %v449
    %568 = vmatpush.bf16.msra.mxu0 %v448
    %569 = vmatpush.bf16.msra.mxu0 %v447
    %570 = vmatpush.bf16.msra.mxu0 %v446
    %571 = vmatmul.bf16.gmra.mxu0 %v120
    %v572 = vpop.f32.mrf.mxu0
    %v573 = vadd.f32 %v560, %v572
    %v574 = vpop.f32.mrf.mxu0
    %575 = vdwg.mxu0
    %576 = vmatpush.bf16.msra.mxu0 %v461
    %577 = vmatpush.bf16.msra.mxu0 %v460
    %578 = vmatpush.bf16.msra.mxu0 %v459
    %579 = vmatpush.bf16.msra.mxu0 %v458
    %580 = vmatpush.bf16.msra.mxu0 %v457
    %581 = vmatpush.bf16.msra.mxu0 %v456
    %582 = vmatpush.bf16.msra.mxu0 %v455
    %583 = vmatpush.bf16.msra.mxu0 %v454
    %584 = vmatmul.bf16.gmra.mxu0 %v121
    %v585 = vpop.f32.mrf.mxu0
    %v586 = vadd.f32 %v573, %v585
    %v587 = vpop.f32.mrf.mxu0
    %588 = vdwg.mxu0
    %589 = vmatpush.bf16.msra.mxu0 %v469
    %590 = vmatpush.bf16.msra.mxu0 %v468
    %591 = vmatpush.bf16.msra.mxu0 %v467
    %592 = vmatpush.bf16.msra.mxu0 %v466
    %593 = vmatpush.bf16.msra.mxu0 %v465
    %594 = vmatpush.bf16.msra.mxu0 %v464
    %595 = vmatpush.bf16.msra.mxu0 %v463
    %596 = vmatpush.bf16.msra.mxu0 %v462
    %597 = vmatmul.bf16.gmra.mxu0 %v122
    %v598 = vpop.f32.mrf.mxu0
    %v599 = vadd.f32 %v586, %v598
    %v600 = vpop.f32.mrf.mxu0
    %601 = vdwg.mxu0
    %602 = vmatpush.bf16.msra.mxu0 0
    %603 = vmatpush.bf16.msra.mxu0 0
    %604 = vmatpush.bf16.msra.mxu0 0
    %605 = vmatpush.bf16.msra.mxu0 0
    %606 = vmatpush.bf16.msra.mxu0 0
    %607 = vmatpush.bf16.msra.mxu0 0
    %608 = vmatpush.bf16.msra.mxu0 0
    %609 = vmatpush.bf16.msra.mxu0 %v470
    %610 = vmatmul.bf16.gmra.mxu0 %v522
    %v611 = vpop.f32.mrf.mxu0
    %v612 = vadd.f32 %v599, %v611
    %v613 = vpop.f32.mrf.mxu0
    %614 = vdwg.mxu0
    %v615 = vmax.f32 %v612, 0.0
    %v616 = vpack.c.bf16 %v615, %v615
    %v617 = vld [vmem:[#allocation7] sm:$0xf]
    %v618 = vld [vmem:[#allocation7 + $0x4] sm:$0xf]
    %v619 = vld [vmem:[#allocation7 + $0x8] sm:$0xf]
    %v620 = vld [vmem:[#allocation7 + $0xc] sm:$0xf]
    %v621 = vld [vmem:[#allocation7 + $0x10] sm:$0xf]
    %v622 = vld [vmem:[#allocation7 + $0x14] sm:$0xf]
    %v623 = vld [vmem:[#allocation7 + $0x18] sm:$0xf]
    %v624 = vld [vmem:[#allocation7 + $0x1c] sm:$0xf]
    %v625 = vld [vmem:[#allocation7 + $0x20] sm:$0xf]
    %v626 = vld [vmem:[#allocation7 + $0x24] sm:$0xf]
    %v627 = vld [vmem:[#allocation7 + $0x28] sm:$0xf]
    %v628 = vld [vmem:[#allocation7 + $0x2c] sm:$0xf]
    %v629 = vld [vmem:[#allocation7 + $0x30] sm:$0xf]
    %v630 = vld [vmem:[#allocation7 + $0x34] sm:$0xf]
    %v631 = vld [vmem:[#allocation7 + $0x38] sm:$0xf]
    %v632 = vld [vmem:[#allocation7 + $0x3c] sm:$0xf]
    %v633 = vld [vmem:[%s4] sm:$0x1]
    %v635 = vperm.slane %v633, 0
    %v653 = vunpack.c.l.b16 %v617
    %v654 = vunpack.c.l.b16 %v618
    %v655 = vunpack.c.l.b16 %v619
    %v656 = vunpack.c.l.b16 %v620
    %v657 = vunpack.c.l.b16 %v621
    %v658 = vunpack.c.l.b16 %v622
    %v659 = vunpack.c.l.b16 %v623
    %v660 = vunpack.c.l.b16 %v624
    %v661 = vunpack.c.l.b16 %v625
    %v662 = vunpack.c.l.b16 %v626
    %v663 = vunpack.c.l.b16 %v627
    %v664 = vunpack.c.l.b16 %v628
    %v665 = vunpack.c.l.b16 %v629
    %v666 = vunpack.c.l.b16 %v630
    %v667 = vunpack.c.l.b16 %v631
    %v668 = vunpack.c.l.b16 %v632
    %v669 = vpack.c.b16 %v654, %v653
    %v670 = vpack.c.b16 %v656, %v655
    %v671 = vpack.c.b16 %v658, %v657
    %v672 = vpack.c.b16 %v660, %v659
    %v673 = vpack.c.b16 %v662, %v661
    %v674 = vpack.c.b16 %v664, %v663
    %v675 = vpack.c.b16 %v666, %v665
    %v676 = vpack.c.b16 %v668, %v667
    %685 = vmatpush.bf16.msra.mxu0 %v676
    %686 = vmatpush.bf16.msra.mxu0 %v675
    %687 = vmatpush.bf16.msra.mxu0 %v674
    %688 = vmatpush.bf16.msra.mxu0 %v673
    %689 = vmatpush.bf16.msra.mxu0 %v672
    %690 = vmatpush.bf16.msra.mxu0 %v671
    %691 = vmatpush.bf16.msra.mxu0 %v670
    %692 = vmatpush.bf16.msra.mxu0 %v669
    %693 = vmatmul.bf16.gmra.mxu0 %v616
    %v694 = vpop.f32.mrf.mxu0
    %v695 = vadd.f32 %v635, %v694
    %v696 = vpop.f32.mrf.mxu0
    %697 = vdwg.mxu0
    %v698 = vmax.f32 %v695, 0.0
    %v699 = vpack.c.bf16 %v698, %v698
    %v700 = vld [vmem:[#allocation8] sm:$0xf]
    %v701 = vld [vmem:[#allocation8 + $0x4] sm:$0xf]
    %v702 = vld [vmem:[#allocation8 + $0x8] sm:$0xf]
    %v703 = vld [vmem:[#allocation8 + $0xc] sm:$0xf]
    %v704 = vld [vmem:[#allocation8 + $0x10] sm:$0xf]
    %v705 = vld [vmem:[#allocation8 + $0x14] sm:$0xf]
    %v706 = vld [vmem:[#allocation8 + $0x18] sm:$0xf]
    %v707 = vld [vmem:[#allocation8 + $0x1c] sm:$0xf]
    %v708 = vld [vmem:[#allocation8 + $0x20] sm:$0xf]
    %v709 = vld [vmem:[#allocation8 + $0x24] sm:$0xf]
    %v710 = vld [vmem:[#allocation8 + $0x28] sm:$0xf]
    %v711 = vld [vmem:[#allocation8 + $0x2c] sm:$0xf]
    %v712 = vld [vmem:[#allocation8 + $0x30] sm:$0xf]
    %v713 = vld [vmem:[#allocation8 + $0x34] sm:$0xf]
    %v714 = vld [vmem:[#allocation8 + $0x38] sm:$0xf]
    %v715 = vld [vmem:[#allocation8 + $0x3c] sm:$0xf]
    %v716 = vld [vmem:[%s6] sm:$0x1]
    %v718 = vperm.slane %v716, 0
    %v736 = vunpack.c.l.b16 %v700
    %v737 = vunpack.c.l.b16 %v701
    %v738 = vunpack.c.l.b16 %v702
    %v739 = vunpack.c.l.b16 %v703
    %v740 = vunpack.c.l.b16 %v704
    %v741 = vunpack.c.l.b16 %v705
    %v742 = vunpack.c.l.b16 %v706
    %v743 = vunpack.c.l.b16 %v707
    %v744 = vunpack.c.l.b16 %v708
    %v745 = vunpack.c.l.b16 %v709
    %v746 = vunpack.c.l.b16 %v710
    %v747 = vunpack.c.l.b16 %v711
    %v748 = vunpack.c.l.b16 %v712
    %v749 = vunpack.c.l.b16 %v713
    %v750 = vunpack.c.l.b16 %v714
    %v751 = vunpack.c.l.b16 %v715
    %v752 = vpack.c.b16 %v737, %v736
    %v753 = vpack.c.b16 %v739, %v738
    %v754 = vpack.c.b16 %v741, %v740
    %v755 = vpack.c.b16 %v743, %v742
    %v756 = vpack.c.b16 %v745, %v744
    %v757 = vpack.c.b16 %v747, %v746
    %v758 = vpack.c.b16 %v749, %v748
    %v759 = vpack.c.b16 %v751, %v750
    %768 = vmatpush.bf16.msra.mxu0 %v759
    %769 = vmatpush.bf16.msra.mxu0 %v758
    %770 = vmatpush.bf16.msra.mxu0 %v757
    %771 = vmatpush.bf16.msra.mxu0 %v756
    %772 = vmatpush.bf16.msra.mxu0 %v755
    %773 = vmatpush.bf16.msra.mxu0 %v754
    %774 = vmatpush.bf16.msra.mxu0 %v753
    %775 = vmatpush.bf16.msra.mxu0 %v752
    %776 = vmatmul.bf16.gmra.mxu0 %v699
    %v777 = vpop.f32.mrf.mxu0
    %v778 = vadd.f32 %v718, %v777
    %v779 = vpop.f32.mrf.mxu0
    %780 = vdwg.mxu0
    %v781 = vmax.f32 %v778, 0.0
    %v782 = vpack.c.bf16 %v781, %v781
    %v783 = vld [vmem:[#allocation10] sm:$0xf]
    %v784 = vld [vmem:[#allocation10 + $0x4] sm:$0xf]
    %v785 = vld [vmem:[#allocation10 + $0x8] sm:$0xf]
    %v786 = vld [vmem:[#allocation10 + $0xc] sm:$0xf]
    %v787 = vld [vmem:[#allocation10 + $0x10] sm:$0xf]
    %v788 = vld [vmem:[#allocation10 + $0x14] sm:$0xf]
    %v789 = vld [vmem:[#allocation10 + $0x18] sm:$0xf]
    %v790 = vld [vmem:[#allocation10 + $0x1c] sm:$0xf]
    %v791 = vld [vmem:[#allocation10 + $0x20] sm:$0xf]
    %v792 = vld [vmem:[#allocation10 + $0x24] sm:$0xf]
    %v793 = vld [vmem:[#allocation10 + $0x28] sm:$0xf]
    %v794 = vld [vmem:[#allocation10 + $0x2c] sm:$0xf]
    %v795 = vld [vmem:[#allocation10 + $0x30] sm:$0xf]
    %v796 = vld [vmem:[#allocation10 + $0x34] sm:$0xf]
    %v797 = vld [vmem:[#allocation10 + $0x38] sm:$0xf]
    %v798 = vld [vmem:[#allocation10 + $0x3c] sm:$0xf]
    %v799 = vld [vmem:[%s8] sm:$0x1]
    %v801 = vperm.slane %v799, 0
    %v819 = vunpack.c.l.b16 %v783
    %v820 = vunpack.c.l.b16 %v784
    %v821 = vunpack.c.l.b16 %v785
    %v822 = vunpack.c.l.b16 %v786
    %v823 = vunpack.c.l.b16 %v787
    %v824 = vunpack.c.l.b16 %v788
    %v825 = vunpack.c.l.b16 %v789
    %v826 = vunpack.c.l.b16 %v790
    %v827 = vunpack.c.l.b16 %v791
    %v828 = vunpack.c.l.b16 %v792
    %v829 = vunpack.c.l.b16 %v793
    %v830 = vunpack.c.l.b16 %v794
    %v831 = vunpack.c.l.b16 %v795
    %v832 = vunpack.c.l.b16 %v796
    %v833 = vunpack.c.l.b16 %v797
    %v834 = vunpack.c.l.b16 %v798
    %v835 = vpack.c.b16 %v820, %v819
    %v836 = vpack.c.b16 %v822, %v821
    %v837 = vpack.c.b16 %v824, %v823
    %v838 = vpack.c.b16 %v826, %v825
    %v839 = vpack.c.b16 %v828, %v827
    %v840 = vpack.c.b16 %v830, %v829
    %v841 = vpack.c.b16 %v832, %v831
    %v842 = vpack.c.b16 %v834, %v833
    %851 = vmatpush.bf16.msra.mxu0 %v842
    %852 = vmatpush.bf16.msra.mxu0 %v841
    %853 = vmatpush.bf16.msra.mxu0 %v840
    %854 = vmatpush.bf16.msra.mxu0 %v839
    %855 = vmatpush.bf16.msra.mxu0 %v838
    %856 = vmatpush.bf16.msra.mxu0 %v837
    %857 = vmatpush.bf16.msra.mxu0 %v836
    %858 = vmatpush.bf16.msra.mxu0 %v835
    %859 = vmatmul.bf16.gmra.mxu0 %v782
    %v860 = vpop.f32.mrf.mxu0
    %v861 = vadd.f32 %v801, %v860
    %v862 = vpop.f32.mrf.mxu0
    %863 = vdwg.mxu0
    %864 = vst [vmem:[#allocation11] sm:$0xff] %v861
    // Predicated region
    $region58: #{mlp_forward.1} parent=1 // pred_check
      _
    $region59: #{mlp_forward.1} parent=1 // pred_check_branch
      %866 = sbr.rel (0) target = $region61
    $region60: #{mlp_forward.1} parent=1 // pred_region
      %868 = vsyncadd [#allocation4], 0
      %s870 = sshll.u32 [#allocation11], 4
      %s871 = int_to_ptr.vmem [resolvable:$true] %s870
      %s872 = sshll.u32 %s9, 4
      %s873 = int_to_ptr.hbm [resolvable:$true] %s872
      %875 = dma.vmem_to_hbm [thread:$0]  %s871, 128, %s873, [#allocation4]
    $region61: #{mlp_forward.1} parent=1 // pred_fallthru
      _
    // Predicated region
    $region62: #{mlp_forward.1} parent=1 // pred_check
      _
    $region63: #{mlp_forward.1} parent=1 // pred_check_branch
      %877 = sbr.rel (0) target = $region65
    $region64: #{mlp_forward.1} parent=1 // pred_region
      %879 = dma.done [#allocation4], 128
    $region65: #{mlp_forward.1} parent=1 // pred_fallthru
      _
    %880 = vsyncpa [#allocation3], 1
    %881 = vsyncpa [#allocation6], 1
    %882 = vsyncpa [#allocation9], 1
    %883 = vsyncpa [#allocation4], 1

</llo_original>
